<compile_context>
chip_gen: v6e
topology: v6e:2x2x1
jax: 0.10.0
libtpu: 0.0.40
codegen_flags: <defaults>
</compile_context>

<pallas_src>
from functools import partial

import jax
import jax.numpy as jnp
from jax.experimental import pallas as pl
from jax.experimental.pallas import tpu as pltpu


def _round_up(x, m):
    return ((x + m - 1) // m) * m


def _vmem_capacity_bytes():
    """Physical VMEM per TensorCore; falls back to the smallest (v7x) part."""
    try:
        info = pltpu.get_tpu_info()
        for attr in ("vmem_capacity_bytes", "vmem_size_bytes", "vmem_bytes"):
            cap = getattr(info, attr, None)
            if cap:
                return int(cap)
    except Exception:
        pass
    return 64 * 1024 * 1024


def _disc_mlp_kernel(x_ref, w1_ref, b1_ref, w2_ref, b2_ref, w3_ref, b3_ref,
                     o_ref, *, mxu_dtype):
    """Fused Linear -> LeakyReLU(0.2) -> Linear -> LeakyReLU(0.2) -> Linear."""
    # Cast to the MXU dtype in-kernel (VPU op, hidden under the x DMA) instead
    # of paying an extra HBM pass in the wrapper.
    x = x_ref[...].astype(mxu_dtype)                           # (bt, D)

    # Layer 1: MXU matmul, f32 accumulation.
    h1 = jnp.dot(x, w1_ref[...], preferred_element_type=jnp.float32)
    h1 = h1 + b1_ref[...]
    h1 = jnp.where(h1 > 0, h1, 0.2 * h1)                       # LeakyReLU(0.2)

    # Layer 2: MXU matmul, f32 accumulation.
    h2 = jnp.dot(h1.astype(mxu_dtype), w2_ref[...],
                 preferred_element_type=jnp.float32)
    h2 = h2 + b2_ref[...]
    h2 = jnp.where(h2 > 0, h2, 0.2 * h2)                       # LeakyReLU(0.2)

    # Layer 3 (out_features == 1): contract w3 (1, H2) with h2 (bt, H2) on the
    # MXU, producing the lane-dense (1, bt) row directly -- no XLU lane-reduce,
    # no transpose.
    out_row = jax.lax.dot_general(
        w3_ref[...], h2,
        dimension_numbers=(((1,), (1,)), ((), ())),
        preferred_element_type=jnp.float32)                    # (1, bt)
    o_ref[...] = (out_row + b3_ref[...]).astype(o_ref.dtype)


def discriminator_forward(x, params, *, batch_tile=None, mxu_dtype=jnp.bfloat16,
                          interpret=False):
    """x: (B, D).  params: dict of w1,b1,w2,b2,w3,b3 with weights as (in, out).

    mxu_dtype: matmul input precision (bf16 default; pass jnp.float32 for a
    full-precision forward matching the PyTorch f32 module more closely).
    Returns (B, 1), matching the PyTorch module.
    """
    B, D = x.shape
    mxu_dtype = jnp.dtype(mxu_dtype)
    w1 = params["w1"].astype(mxu_dtype)
    w2 = params["w2"].astype(mxu_dtype)
    b1 = params["b1"].astype(jnp.float32).reshape(1, -1)
    b2 = params["b2"].astype(jnp.float32).reshape(1, -1)
    w3 = params["w3"].astype(jnp.float32).reshape(1, -1)       # (1, H2) row
    b3 = params["b3"].astype(jnp.float32).reshape(1, 1)        # (1, 1)
    H1, H2 = w1.shape[1], w2.shape[1]

    x_isz = jnp.dtype(x.dtype).itemsize
    m_isz = mxu_dtype.itemsize
    out_dtype = x.dtype
    out_isz = jnp.dtype(out_dtype).itemsize

    # Resident operands (weights + biases).  Constant-index blocks avoid
    # re-fetch but Pallas still allocates the default two buffers each, so
    # budget 2x their bytes when sizing the x tile / VMEM limit.
    weight_bytes = (w1.size * m_isz + w2.size * m_isz
                    + b1.size * 4 + b2.size * 4 + w3.size * 4 + b3.size * 4)

    # Per-row VMEM cost: double-buffered x block, the in-kernel mxu_dtype
    # copies of x and h1, f32 h1/h2 intermediates, double-buffered output row.
    per_row = (2 * D * x_isz + D * m_isz
               + H1 * (4 + m_isz) + H2 * 4
               + 2 * out_isz)

    vmem_cap = _vmem_capacity_bytes()

    # ---- batch tile selection -------------------------------------------
    if batch_tile is None:
        usable = int(0.75 * vmem_cap) - 2 * weight_bytes - (2 << 20)
        bt = usable // per_row if usable > 0 else 128
        # Big tiles amortize the ~0.35 us per-grid-step overhead; 8192 rows is
        # plenty while staying comfortably inside VMEM for typical D.
        bt = max(128, min(int(bt), 8192))
    else:
        bt = max(8, int(batch_tile))

    if bt >= B:
        bt = B                      # single step; whole-array blocks are legal
        # Keep >= 2 grid steps when the batch allows it so v7x's second
        # TensorCore gets work; costs nothing on single-core v5e/v6e.
        if batch_tile is None and B >= 256:
            bt = _round_up(-(-B // 2), 128)
    if bt < B:
        bt = _round_up(bt, 128)     # multi-step: lane-aligned (1, bt) output
                                    # block and sublane-aligned x tile
    grid_len = pl.cdiv(B, bt)
    b_pad = grid_len * bt           # padded output columns (extra cols dropped;
                                    # partially-OOB x blocks feed only those)

    # Scoped-VMEM limit from the actual footprint: raises v5e's 16 MiB default,
    # stays under the physical capacity (64 MiB/TC on v7x, 128 MiB on v5e/v6e).
    footprint = 2 * weight_bytes + bt * per_row + (4 << 20)
    vmem_limit = int(min(max(footprint, 32 << 20),
                         max(32 << 20, int(0.9 * vmem_cap))))

    # Weights/biases: full-array blocks with a constant index map stay resident
    # in VMEM across grid steps (no re-fetch).
    full = lambda shape: pl.BlockSpec(shape, lambda i: (0,) * len(shape))

    out_row = pl.pallas_call(
        partial(_disc_mlp_kernel, mxu_dtype=mxu_dtype),
        out_shape=jax.ShapeDtypeStruct((1, b_pad), out_dtype),
        grid_spec=pltpu.PrefetchScalarGridSpec(
            num_scalar_prefetch=0,
            grid=(grid_len,),
            in_specs=[
                pl.BlockSpec((bt, D), lambda i: (i, 0)),       # x tile (pipelined)
                full((D, H1)), full((1, H1)),                  # layer 1
                full((H1, H2)), full((1, H2)),                 # layer 2
                full((1, H2)), full((1, 1)),                   # layer 3
            ],
            out_specs=pl.BlockSpec((1, bt), lambda i: (0, i)),
        ),
        compiler_params=pltpu.CompilerParams(
            dimension_semantics=("parallel",),                 # megacore shards batch
            vmem_limit_bytes=vmem_limit,
        ),
        interpret=interpret,
    )(x, w1, b1, w2, b2, w3, b3)

    # Lane-dense (1, b_pad) row -> PyTorch-style (B, 1) column.
    return out_row[0, :B].reshape(B, 1)


def init_discriminator_params(key, input_dim):
    """Mimics PyTorch default Linear init: U(-1/sqrt(fan_in), 1/sqrt(fan_in))."""
    h1 = 2 * input_dim // 3
    h2 = input_dim // 3
    dims = [(input_dim, h1), (h1, h2), (h2, 1)]
    params = {}
    keys = jax.random.split(key, 6)
    for li, (fin, fout) in enumerate(dims, start=1):
        bound = 1.0 / jnp.sqrt(float(fin))
        params[f"w{li}"] = jax.random.uniform(
            keys[2 * (li - 1)], (fin, fout), minval=-bound, maxval=bound,
            dtype=jnp.float32)
        params[f"b{li}"] = jax.random.uniform(
            keys[2 * (li - 1) + 1], (1, fout), minval=-bound, maxval=bound,
            dtype=jnp.float32)
    return params


def _reference_forward(x, p, compute_dtype=jnp.float32):
    """Plain-JAX reference; compute_dtype=bfloat16 mirrors the kernel's MXU dtype."""
    xw = x.astype(compute_dtype)
    w1 = p["w1"].astype(compute_dtype)
    w2 = p["w2"].astype(compute_dtype)
    h1 = jnp.dot(xw, w1, preferred_element_type=jnp.float32) + p["b1"]
    h1 = jnp.where(h1 > 0, h1, 0.2 * h1)
    h2 = jnp.dot(h1.astype(compute_dtype), w2,
                 preferred_element_type=jnp.float32) + p["b2"]
    h2 = jnp.where(h2 > 0, h2, 0.2 * h2)
    return jnp.dot(h2, p["w3"]) + p["b3"]


if __name__ == "__main__":
    key = jax.random.PRNGKey(0)
    kx, kp, kx2 = jax.random.split(key, 3)

    batch, input_dim = 8, 48          # hidden dims: 32 and 16
    x = jax.random.normal(kx, (batch, input_dim), dtype=jnp.float32)
    params = init_discriminator_params(kp, input_dim)

    ref_bf16 = _reference_forward(x, params, compute_dtype=jnp.bfloat16)
    ref_f32 = _reference_forward(x, params, compute_dtype=jnp.float32)

    # Default (bf16-MXU) path, single grid step.
    out = jax.block_until_ready(discriminator_forward(x, params))
    assert out.shape == (batch, 1)
    assert jnp.allclose(out, ref_bf16, atol=5e-3, rtol=5e-3), "mismatch vs bf16 reference"
    assert jnp.allclose(out, ref_f32, atol=1e-1, rtol=1e-1), "mismatch vs f32 reference"

    # Opt-in full-precision (f32-MXU) path.
    out_f32 = jax.block_until_ready(
        discriminator_forward(x, params, mxu_dtype=jnp.float32))
    assert jnp.allclose(out_f32, ref_f32, atol=5e-2, rtol=5e-2), "mismatch vs f32 reference (f32 MXU)"

    # Larger batch: auto tiler picks >= 2 grid steps (megacore path) with a
    # partial last x block + multi-block lane-dense output.
    batch2 = 300
    x2 = jax.random.normal(kx2, (batch2, input_dim), dtype=jnp.float32)
    ref2 = _reference_forward(x2, params, compute_dtype=jnp.bfloat16)

    out2 = jax.block_until_ready(discriminator_forward(x2, params))
    assert out2.shape == (batch2, 1)
    assert jnp.allclose(out2, ref2, atol=5e-3, rtol=5e-3), "mismatch vs reference (auto-tiled)"

    # Explicit user-provided tile exercising a 3-step grid.
    out3 = jax.block_until_ready(
        discriminator_forward(x2, params, batch_tile=128))
    assert out3.shape == (batch2, 1)
    assert jnp.allclose(out3, ref2, atol=5e-3, rtol=5e-3), "mismatch vs reference (tile=128)"

    print("KERNEL_OK")
</pallas_src>

<mosaic_0001>
module attributes {stable_mosaic.version = 11 : i64} {
  func.func @_disc_mlp_kernel(%arg0: i32, %arg1: memref<8x48xf32, #tpu.memory_space<vmem>>, %arg2: memref<48x32xbf16, #tpu.memory_space<vmem>>, %arg3: memref<1x32xf32, #tpu.memory_space<vmem>>, %arg4: memref<32x16xbf16, #tpu.memory_space<vmem>>, %arg5: memref<1x16xf32, #tpu.memory_space<vmem>>, %arg6: memref<1x16xf32, #tpu.memory_space<vmem>>, %arg7: memref<1x1xf32, #tpu.memory_space<vmem>>, %arg8: memref<1x8xf32, #tpu.memory_space<vmem>>) attributes {dimension_semantics = [#tpu.dimension_semantics<parallel>], iteration_bounds = array<i64: 1>, scalar_prefetch = 0 : i64, scratch_operands = 0 : i64, tpu.core_type = #tpu.core_type<tc>, window_params = [{transform_indices = @transform_0, window_bounds = array<i64: 8, 48>}, {pipeline_mode = #tpu.pipeline_mode<synchronous>, transform_indices = @transform_1, window_bounds = array<i64: 48, 32>}, {pipeline_mode = #tpu.pipeline_mode<synchronous>, transform_indices = @transform_2, window_bounds = array<i64: 1, 32>}, {pipeline_mode = #tpu.pipeline_mode<synchronous>, transform_indices = @transform_3, window_bounds = array<i64: 32, 16>}, {pipeline_mode = #tpu.pipeline_mode<synchronous>, transform_indices = @transform_4, window_bounds = array<i64: 1, 16>}, {pipeline_mode = #tpu.pipeline_mode<synchronous>, transform_indices = @transform_5, window_bounds = array<i64: 1, 16>}, {pipeline_mode = #tpu.pipeline_mode<synchronous>, transform_indices = @transform_6, window_bounds = array<i64: 1, 1>}, {transform_indices = @transform_7, window_bounds = array<i64: 1, 8>}]} {
    %c0 = arith.constant 0 : index
    %c0_0 = arith.constant 0 : index
    %0 = vector.load %arg1[%c0, %c0_0] : memref<8x48xf32, #tpu.memory_space<vmem>>, vector<8x48xf32>
    %1 = arith.truncf %0 : vector<8x48xf32> to vector<8x48xbf16>
    %c0_1 = arith.constant 0 : index
    %c0_2 = arith.constant 0 : index
    %2 = vector.load %arg2[%c0_1, %c0_2] : memref<48x32xbf16, #tpu.memory_space<vmem>>, vector<48x32xbf16>
    %cst = arith.constant dense<0.000000e+00> : vector<8x32xf32>
    %3 = tpu.matmul %1, %2, %cst {dimension_numbers = #tpu.dot_dimension_numbers<[1], [0], [0], [1], [0, 0, 1, 1], [], []>} : vector<8x48xbf16>, vector<48x32xbf16>, vector<8x32xf32> -> vector<8x32xf32>
    %c0_3 = arith.constant 0 : index
    %c0_4 = arith.constant 0 : index
    %4 = vector.load %arg3[%c0_3, %c0_4] : memref<1x32xf32, #tpu.memory_space<vmem>>, vector<1x32xf32>
    %5 = vector.broadcast %4 : vector<1x32xf32> to vector<8x32xf32>
    %6 = arith.addf %3, %5 : vector<8x32xf32>
    %cst_5 = arith.constant 0.000000e+00 : f32
    %7 = vector.broadcast %cst_5 : f32 to vector<8x32xf32>
    %8 = arith.cmpf ogt, %6, %7 : vector<8x32xf32>
    %cst_6 = arith.constant 2.000000e-01 : f32
    %9 = vector.broadcast %cst_6 : f32 to vector<8x32xf32>
    %10 = arith.mulf %9, %6 : vector<8x32xf32>
    %11 = arith.select %8, %6, %10 : vector<8x32xi1>, vector<8x32xf32>
    %12 = arith.truncf %11 : vector<8x32xf32> to vector<8x32xbf16>
    %c0_7 = arith.constant 0 : index
    %c0_8 = arith.constant 0 : index
    %13 = vector.load %arg4[%c0_7, %c0_8] : memref<32x16xbf16, #tpu.memory_space<vmem>>, vector<32x16xbf16>
    %cst_9 = arith.constant dense<0.000000e+00> : vector<8x16xf32>
    %14 = tpu.matmul %12, %13, %cst_9 {dimension_numbers = #tpu.dot_dimension_numbers<[1], [0], [0], [1], [0, 0, 1, 1], [], []>} : vector<8x32xbf16>, vector<32x16xbf16>, vector<8x16xf32> -> vector<8x16xf32>
    %c0_10 = arith.constant 0 : index
    %c0_11 = arith.constant 0 : index
    %15 = vector.load %arg5[%c0_10, %c0_11] : memref<1x16xf32, #tpu.memory_space<vmem>>, vector<1x16xf32>
    %16 = vector.broadcast %15 : vector<1x16xf32> to vector<8x16xf32>
    %17 = arith.addf %14, %16 : vector<8x16xf32>
    %cst_12 = arith.constant 0.000000e+00 : f32
    %18 = vector.broadcast %cst_12 : f32 to vector<8x16xf32>
    %19 = arith.cmpf ogt, %17, %18 : vector<8x16xf32>
    %cst_13 = arith.constant 2.000000e-01 : f32
    %20 = vector.broadcast %cst_13 : f32 to vector<8x16xf32>
    %21 = arith.mulf %20, %17 : vector<8x16xf32>
    %22 = arith.select %19, %17, %21 : vector<8x16xi1>, vector<8x16xf32>
    %c0_14 = arith.constant 0 : index
    %c0_15 = arith.constant 0 : index
    %23 = vector.load %arg6[%c0_14, %c0_15] : memref<1x16xf32, #tpu.memory_space<vmem>>, vector<1x16xf32>
    %cst_16 = arith.constant dense<0.000000e+00> : vector<1x8xf32>
    %24 = tpu.matmul %23, %22, %cst_16 {dimension_numbers = #tpu.dot_dimension_numbers<[1], [1], [0], [0], [0, 0, 1, 0], [], []>} : vector<1x16xf32>, vector<8x16xf32>, vector<1x8xf32> -> vector<1x8xf32>
    %c0_17 = arith.constant 0 : index
    %c0_18 = arith.constant 0 : index
    %25 = vector.load %arg7[%c0_17, %c0_18] : memref<1x1xf32, #tpu.memory_space<vmem>>, vector<1x1xf32>
    %26 = vector.broadcast %25 : vector<1x1xf32> to vector<1x8xf32>
    %27 = arith.addf %24, %26 : vector<1x8xf32>
    %c0_19 = arith.constant 0 : index
    %c0_20 = arith.constant 0 : index
    %28 = vector.load %arg8[%c0_19, %c0_20] : memref<1x8xf32, #tpu.memory_space<vmem>>, vector<1x8xf32>
    tpu.vector_store %arg8[%c0_19, %c0_20], %27 {strides = array<i32>} : memref<1x8xf32, #tpu.memory_space<vmem>>, vector<1x8xf32>,
    return
  }
  func.func @transform_0(%arg0: i32) -> (i32, i32) {
    %c0_i32 = arith.constant 0 : i32
    %c0_i32_0 = arith.constant 0 : i32
    return %arg0, %c0_i32 : i32, i32
  }
  func.func @transform_1(%arg0: i32) -> (i32, i32) {
    %c0_i32 = arith.constant 0 : i32
    %c0_i32_0 = arith.constant 0 : i32
    %c0_i32_1 = arith.constant 0 : i32
    return %c0_i32, %c0_i32_0 : i32, i32
  }
  func.func @transform_2(%arg0: i32) -> (i32, i32) {
    %c0_i32 = arith.constant 0 : i32
    %c0_i32_0 = arith.constant 0 : i32
    %c0_i32_1 = arith.constant 0 : i32
    return %c0_i32, %c0_i32_0 : i32, i32
  }
  func.func @transform_3(%arg0: i32) -> (i32, i32) {
    %c0_i32 = arith.constant 0 : i32
    %c0_i32_0 = arith.constant 0 : i32
    %c0_i32_1 = arith.constant 0 : i32
    return %c0_i32, %c0_i32_0 : i32, i32
  }
  func.func @transform_4(%arg0: i32) -> (i32, i32) {
    %c0_i32 = arith.constant 0 : i32
    %c0_i32_0 = arith.constant 0 : i32
    %c0_i32_1 = arith.constant 0 : i32
    return %c0_i32, %c0_i32_0 : i32, i32
  }
  func.func @transform_5(%arg0: i32) -> (i32, i32) {
    %c0_i32 = arith.constant 0 : i32
    %c0_i32_0 = arith.constant 0 : i32
    %c0_i32_1 = arith.constant 0 : i32
    return %c0_i32, %c0_i32_0 : i32, i32
  }
  func.func @transform_6(%arg0: i32) -> (i32, i32) {
    %c0_i32 = arith.constant 0 : i32
    %c0_i32_0 = arith.constant 0 : i32
    %c0_i32_1 = arith.constant 0 : i32
    return %c0_i32, %c0_i32_0 : i32, i32
  }
  func.func @transform_7(%arg0: i32) -> (i32, i32) {
    %c0_i32 = arith.constant 0 : i32
    %c0_i32_0 = arith.constant 0 : i32
    return %c0_i32, %arg0 : i32, i32
  }
}

</mosaic_0001>

<llo_original>
// kernel: tpu_custom_call.1
$region0: #{tpu_custom_call.1}
  #allocation0 [shape = 'u32[]', space=smem, size = 0x4, offset = 0x4, fixed_abs, tag = 'smem constant byte address 0x4 - core index']
  #allocation1 [shape = 'u32[144,128]{1,0:T(1,128)}', space=vmem, size = 0x12000, scoped, tag = 'internal scratch']
  #allocation2 [shape = 'f32[1,1]{1,0:T(1,128)S(1)}', space=vmem, size = 0x200, scoped, tag = 'scoped memory for tpu_custom_call.1']
  %s0 = inlined_call_operand.vmem [shape: f32[8,48], index: 0, kind: input, shape index: {}]
  %s1 = inlined_call_operand.vmem [shape: bf16[48,32], index: 1, kind: input, shape index: {}]
  %s2 = inlined_call_operand.vmem [shape: f32[1,32], index: 2, kind: input, shape index: {}]
  %s3 = inlined_call_operand.vmem [shape: bf16[32,16], index: 3, kind: input, shape index: {}]
  %s4 = inlined_call_operand.vmem [shape: f32[1,16], index: 4, kind: input, shape index: {}]
  %s5 = inlined_call_operand.vmem [shape: f32[1,16], index: 5, kind: input, shape index: {}]
  %s6 = inlined_call_operand.<no memory space> [shape: f32[1,1], index: 6, kind: input, shape index: {}]
  %s7 = inlined_call_operand.hbm [shape: f32[1,8], index: 7, kind: output, shape index: {}]
  %s8 = sld [smem:[#allocation0]]
  $region38: #{tpu_custom_call.1} parent=0
    _
  %s10 = ssub.s32 1, %s8
  %s11 = scalar_select 0, %s10, %s8
  %v12 = vstv %s6
  %13 = vst [vmem:[#allocation2] sm:$0x1] %v12
  $region1: #{tpu_custom_call.1} parent=0
    #allocation3 [shape = 'u8[512]{0}', space=vmem, size = 0x400, scoped, tag = 'output window, operand 0, single buffered']
    #allocation4 [shape = 's32[1]{0}', space=sflag, size = 0x4, scoped, tag = 'scoped memory for tpu_custom_call.1']
    %14 = vsyncpa [#allocation4], 0
    // Predicated region
    $region2: #{tpu_custom_call.1} parent=1 // pred_check
      _
    $region3: #{tpu_custom_call.1} parent=1 // pred_check_branch
      %16 = sbr.rel (0) target = $region5
    $region4: #{tpu_custom_call.1} parent=1 // pred_region
      _
    $region5: #{tpu_custom_call.1} parent=1 // pred_fallthru
      _
    // Predicated region
    $region6: #{tpu_custom_call.1} parent=1 // pred_check
      _
    $region7: #{tpu_custom_call.1} parent=1 // pred_check_branch
      %18 = sbr.rel (0) target = $region9
    $region8: #{tpu_custom_call.1} parent=1 // pred_region
      _
    $region9: #{tpu_custom_call.1} parent=1 // pred_fallthru
      _
    // Predicated region
    $region10: #{tpu_custom_call.1} parent=1 // pred_check
      _
    $region11: #{tpu_custom_call.1} parent=1 // pred_check_branch
      %20 = sbr.rel (0) target = $region13
    $region12: #{tpu_custom_call.1} parent=1 // pred_region
      _
    $region13: #{tpu_custom_call.1} parent=1 // pred_fallthru
      _
    // Predicated region
    $region14: #{tpu_custom_call.1} parent=1 // pred_check
      _
    $region15: #{tpu_custom_call.1} parent=1 // pred_check_branch
      %22 = sbr.rel (0) target = $region17
    $region16: #{tpu_custom_call.1} parent=1 // pred_region
      _
    $region17: #{tpu_custom_call.1} parent=1 // pred_fallthru
      _
    // Predicated region
    $region18: #{tpu_custom_call.1} parent=1 // pred_check
      _
    $region19: #{tpu_custom_call.1} parent=1 // pred_check_branch
      %24 = sbr.rel (0) target = $region21
    $region20: #{tpu_custom_call.1} parent=1 // pred_region
      _
    $region21: #{tpu_custom_call.1} parent=1 // pred_fallthru
      _
    // Predicated region
    $region22: #{tpu_custom_call.1} parent=1 // pred_check
      _
    $region23: #{tpu_custom_call.1} parent=1 // pred_check_branch
      %26 = sbr.rel (0) target = $region25
    $region24: #{tpu_custom_call.1} parent=1 // pred_region
      _
    $region25: #{tpu_custom_call.1} parent=1 // pred_fallthru
      _
    // Predicated region
    $region26: #{tpu_custom_call.1} parent=1 // pred_check
      _
    $region27: #{tpu_custom_call.1} parent=1 // pred_check_branch
      %28 = sbr.rel (0) target = $region29
    $region28: #{tpu_custom_call.1} parent=1 // pred_region
      _
    $region29: #{tpu_custom_call.1} parent=1 // pred_fallthru
      _
    %v30 = vld [vmem:[%s0] sm:$0xff]
    %v31 = vpack.c.bf16 %v30, %v30
    %v32 = vld [vmem:[%s1] sm:$0xf]
    %v33 = vld [vmem:[%s1 + $0x4] sm:$0xf]
    %v34 = vld [vmem:[%s1 + $0x8] sm:$0xf]
    %v35 = vld [vmem:[%s1 + $0xc] sm:$0xf]
    %v36 = vld [vmem:[%s1 + $0x10] sm:$0xf]
    %v37 = vld [vmem:[%s1 + $0x14] sm:$0xf]
    %v38 = vld [vmem:[%s2] sm:$0x1]
    %v40 = vlaneseq
    %v41 = vshrl.u32 %v40, 7
    %v42 = vsub.s32 0, %v41
    %v43 = vrot.slane %v38, %v42
    %v51 = vunpack.c.l.b16 %v32
    %v52 = vunpack.c.l.b16 %v33
    %v53 = vunpack.c.l.b16 %v34
    %v54 = vunpack.c.l.b16 %v35
    %v55 = vunpack.c.l.b16 %v36
    %v56 = vunpack.c.l.b16 %v37
    %v57 = vpack.c.b16 %v52, %v51
    %v58 = vpack.c.b16 %v54, %v53
    %v59 = vpack.c.b16 %v56, %v55
    %vm63 = vcmask 392192
    %v65 = vsel %vm63, %v31, 0
    %67 = vmatprep.subr.bf16.mxu0 0
    %68 = vmatpush1.bf16.msra.mxu0 0
    %69 = vmatprep.subr.bf16.mxu0 0
    %70 = vmatpush1.bf16.msra.mxu0 0
    %71 = vmatprep.subr.bf16.mxu0 0
    %72 = vmatpush1.bf16.msra.mxu0 0
    %73 = vmatprep.subr.bf16.mxu0 0
    %74 = vmatpush1.bf16.msra.mxu0 0
    %75 = vmatprep.subr.bf16.mxu0 0
    %76 = vmatpush1.bf16.msra.mxu0 0
    %77 = vmatprep.subr.bf16.mxu0 0
    %78 = vmatpush1.bf16.msra.mxu0 %v59
    %79 = vmatprep.subr.bf16.mxu0 0
    %80 = vmatpush1.bf16.msra.mxu0 %v58
    %81 = vmatprep.subr.bf16.mxu0 0
    %82 = vmatpush1.bf16.msra.mxu0 %v57
    %83 = vmatprep.subr.bf16.mxu0 0
    %84 = vmatpush2.bf16.msra.mxu0 0
    %85 = vmatprep.subr.bf16.mxu0 0
    %86 = vmatpush2.bf16.msra.mxu0 0
    %87 = vmatprep.subr.bf16.mxu0 0
    %88 = vmatpush2.bf16.msra.mxu0 0
    %89 = vmatprep.subr.bf16.mxu0 0
    %90 = vmatpush2.bf16.msra.mxu0 0
    %91 = vmatprep.subr.bf16.mxu0 0
    %92 = vmatpush2.bf16.msra.mxu0 0
    %93 = vmatprep.subr.bf16.mxu0 0
    %94 = vmatpush2.bf16.msra.mxu0 0
    %95 = vmatprep.subr.bf16.mxu0 0
    %96 = vmatpush2.bf16.msra.mxu0 0
    %97 = vmatprep.subr.bf16.mxu0 0
    %98 = vmatpush2.bf16.msra.mxu0 0
    %99 = vmatprep.mubr.bf16.mxu0 0
    %100 = vmatmul.mubr.bf16.gmra.mxu0 %v65
    %v101 = vpop.f32.mrf.mxu0
    %v102 = vadd.f32 %v43, %v101
    %v103 = vpop.f32.mrf.mxu0
    %v104 = vpop.f32.mrf.mxu0
    %v105 = vpop.f32.mrf.mxu0
    %106 = vdwg.mxu0
    %vm107 = vcmp.gt.f32.partialorder %v102, 0.0
    %v108 = vmul.f32 %v102, 0.2
    %v109 = vsel %vm107, %v102, %v108
    %v110 = vpack.c.bf16 %v109, %v109
    %v111 = vld [vmem:[%s3] sm:$0xf]
    %v112 = vld [vmem:[%s3 + $0x4] sm:$0xf]
    %v113 = vld [vmem:[%s3 + $0x8] sm:$0xf]
    %v114 = vld [vmem:[%s3 + $0xc] sm:$0xf]
    %v115 = vld [vmem:[%s4] sm:$0x1]
    %v117 = vlaneseq
    %v118 = vshrl.u32 %v117, 7
    %v119 = vsub.s32 0, %v118
    %v120 = vrot.slane %v115, %v119
    %v126 = vunpack.c.l.b16 %v111
    %v127 = vunpack.c.l.b16 %v112
    %v128 = vunpack.c.l.b16 %v113
    %v129 = vunpack.c.l.b16 %v114
    %v130 = vpack.c.b16 %v127, %v126
    %v131 = vpack.c.b16 %v129, %v128
    %vm134 = vcmask 261120
    %v136 = vsel %vm134, %v110, 0
    %138 = vmatprep.subr.bf16.mxu0 0
    %139 = vmatpush1.bf16.msra.mxu0 0
    %140 = vmatprep.subr.bf16.mxu0 0
    %141 = vmatpush1.bf16.msra.mxu0 0
    %142 = vmatprep.subr.bf16.mxu0 0
    %143 = vmatpush1.bf16.msra.mxu0 0
    %144 = vmatprep.subr.bf16.mxu0 0
    %145 = vmatpush1.bf16.msra.mxu0 0
    %146 = vmatprep.subr.bf16.mxu0 0
    %147 = vmatpush1.bf16.msra.mxu0 0
    %148 = vmatprep.subr.bf16.mxu0 0
    %149 = vmatpush1.bf16.msra.mxu0 0
    %150 = vmatprep.subr.bf16.mxu0 0
    %151 = vmatpush1.bf16.msra.mxu0 %v131
    %152 = vmatprep.subr.bf16.mxu0 0
    %153 = vmatpush1.bf16.msra.mxu0 %v130
    %154 = vmatprep.subr.bf16.mxu0 0
    %155 = vmatpush2.bf16.msra.mxu0 0
    %156 = vmatprep.subr.bf16.mxu0 0
    %157 = vmatpush2.bf16.msra.mxu0 0
    %158 = vmatprep.subr.bf16.mxu0 0
    %159 = vmatpush2.bf16.msra.mxu0 0
    %160 = vmatprep.subr.bf16.mxu0 0
    %161 = vmatpush2.bf16.msra.mxu0 0
    %162 = vmatprep.subr.bf16.mxu0 0
    %163 = vmatpush2.bf16.msra.mxu0 0
    %164 = vmatprep.subr.bf16.mxu0 0
    %165 = vmatpush2.bf16.msra.mxu0 0
    %166 = vmatprep.subr.bf16.mxu0 0
    %167 = vmatpush2.bf16.msra.mxu0 0
    %168 = vmatprep.subr.bf16.mxu0 0
    %169 = vmatpush2.bf16.msra.mxu0 0
    %170 = vmatprep.mubr.bf16.mxu0 0
    %171 = vmatmul.mubr.bf16.gmra.mxu0 %v136
    %v172 = vpop.f32.mrf.mxu0
    %v173 = vadd.f32 %v120, %v172
    %v174 = vpop.f32.mrf.mxu0
    %v175 = vpop.f32.mrf.mxu0
    %v176 = vpop.f32.mrf.mxu0
    %177 = vdwg.mxu0
    %vm178 = vcmp.gt.f32.partialorder %v173, 0.0
    %v179 = vmul.f32 %v173, 0.2
    %v180 = vsel %vm178, %v173, %v179
    %v181 = vld [vmem:[%s5] sm:$0x1]
    %v182 = vld [vmem:[#allocation2] sm:$0x1]
    %184 = vset.pattern.permute.xlu0 0
    %185 = vperm.xlu0 %184, %v182
    %v186 = vpop.permute.xlu0 %185
    %v188 = vlaneseq
    %v189 = vshrl.u32 %v188, 7
    %v190 = vsub.s32 0, %v189
    %v191 = vrot.slane %v186, %v190
    %vm192 = vcmask 130048
    %v194 = vsel %vm192, %v181, 0
    %v197 = vsel %vm192, %v180, 0
    %199 = vmatprep.subr.mxu0 0.0
    %200 = vmatpush1.xpose.msra.mxu0 0.0
    %201 = vmatprep.subr.mxu0 0.0
    %202 = vmatpush1.xpose.msra.mxu0 0.0
    %203 = vmatprep.subr.mxu0 0.0
    %204 = vmatpush1.xpose.msra.mxu0 0.0
    %205 = vmatprep.subr.mxu0 0.0
    %206 = vmatpush1.xpose.msra.mxu0 0.0
    %207 = vmatprep.subr.mxu0 0.0
    %208 = vmatpush1.xpose.msra.mxu0 0.0
    %209 = vmatprep.subr.mxu0 0.0
    %210 = vmatpush1.xpose.msra.mxu0 0.0
    %211 = vmatprep.subr.mxu0 0.0
    %212 = vmatpush1.xpose.msra.mxu0 0.0
    %213 = vmatprep.subr.mxu0 0.0
    %214 = vmatpush1.xpose.msra.mxu0 0.0
    %215 = vmatprep.subr.mxu0 0.0
    %216 = vmatpush1.xpose.msra.mxu0 0.0
    %217 = vmatprep.subr.mxu0 0.0
    %218 = vmatpush1.xpose.msra.mxu0 0.0
    %219 = vmatprep.subr.mxu0 0.0
    %220 = vmatpush1.xpose.msra.mxu0 0.0
    %221 = vmatprep.subr.mxu0 0.0
    %222 = vmatpush1.xpose.msra.mxu0 0.0
    %223 = vmatprep.subr.mxu0 0.0
    %224 = vmatpush1.xpose.msra.mxu0 0.0
    %225 = vmatprep.subr.mxu0 0.0
    %226 = vmatpush1.xpose.msra.mxu0 0.0
    %227 = vmatprep.subr.mxu0 0.0
    %228 = vmatpush1.xpose.msra.mxu0 0.0
    %229 = vmatprep.subr.mxu0 0.0
    %230 = vmatpush1.xpose.msra.mxu0 %v197
    %231 = vmatprep.subr.mxu0 0.0
    %232 = vmatpush2.xpose.msra.mxu0 0.0
    %233 = vmatprep.subr.mxu0 0.0
    %234 = vmatpush2.xpose.msra.mxu0 0.0
    %235 = vmatprep.subr.mxu0 0.0
    %236 = vmatpush2.xpose.msra.mxu0 0.0
    %237 = vmatprep.subr.mxu0 0.0
    %238 = vmatpush2.xpose.msra.mxu0 0.0
    %239 = vmatprep.subr.mxu0 0.0
    %240 = vmatpush2.xpose.msra.mxu0 0.0
    %241 = vmatprep.subr.mxu0 0.0
    %242 = vmatpush2.xpose.msra.mxu0 0.0
    %243 = vmatprep.subr.mxu0 0.0
    %244 = vmatpush2.xpose.msra.mxu0 0.0
    %245 = vmatprep.subr.mxu0 0.0
    %246 = vmatpush2.xpose.msra.mxu0 0.0
    %247 = vmatprep.subr.mxu0 0.0
    %248 = vmatpush2.xpose.msra.mxu0 0.0
    %249 = vmatprep.subr.mxu0 0.0
    %250 = vmatpush2.xpose.msra.mxu0 0.0
    %251 = vmatprep.subr.mxu0 0.0
    %252 = vmatpush2.xpose.msra.mxu0 0.0
    %253 = vmatprep.subr.mxu0 0.0
    %254 = vmatpush2.xpose.msra.mxu0 0.0
    %255 = vmatprep.subr.mxu0 0.0
    %256 = vmatpush2.xpose.msra.mxu0 0.0
    %257 = vmatprep.subr.mxu0 0.0
    %258 = vmatpush2.xpose.msra.mxu0 0.0
    %259 = vmatprep.subr.mxu0 0.0
    %260 = vmatpush2.xpose.msra.mxu0 0.0
    %261 = vmatprep.subr.mxu0 0.0
    %262 = vmatpush2.xpose.msra.mxu0 0.0
    %263 = vmatprep.mubr.f32.mxu0 0.0
    %264 = vmatmul.mubr.f32.gmra.mxu0 %v194
    %v265 = vpop.f32.mrf.mxu0
    %v266 = vadd.f32 %v191, %v265
    %v267 = vpop.f32.mrf.mxu0
    %268 = vdwg.mxu0
    %vm269 = vcmask 57344
    %270 = vst.msk [vmem:[#allocation3] sm:$0x1] %vm269, %v266
    // Predicated region
    $region30: #{tpu_custom_call.1} parent=1 // pred_check
      _
    $region31: #{tpu_custom_call.1} parent=1 // pred_check_branch
      %272 = sbr.rel (0) target = $region33
    $region32: #{tpu_custom_call.1} parent=1 // pred_region
      %s274 = ssub.s32 16, 16
      %275 = vsyncadd [#allocation4], %s274
      %s277 = sshll.u32 [#allocation3], 4
      %s278 = int_to_ptr.vmem [resolvable:$true] %s277
      %280 = dma.vmem_to_hbm [thread:$0]  %s278, 16, %s7, [#allocation4]
    $region33: #{tpu_custom_call.1} parent=1 // pred_fallthru
      _
    // Predicated region
    $region34: #{tpu_custom_call.1} parent=1 // pred_check
      _
    $region35: #{tpu_custom_call.1} parent=1 // pred_check_branch
      %282 = sbr.rel (0) target = $region37
    $region36: #{tpu_custom_call.1} parent=1 // pred_region
      %283 = dma.done [#allocation4], 16
    $region37: #{tpu_custom_call.1} parent=1 // pred_fallthru
      _
    %284 = vsyncpa [#allocation4], 1

</llo_original>
